<compile_context>
chip_gen: v6e
topology: v6e:2x2x1
jax: 0.10.0
libtpu: 0.0.40
codegen_flags: <defaults>
</compile_context>

<pallas_src>
import math
import jax
import jax.numpy as jnp
from jax.experimental import pallas as pl
from jax.experimental.pallas import tpu as pltpu


def _cat(parts, axis):
    """concatenate that is a no-op for a single operand."""
    return parts[0] if len(parts) == 1 else jnp.concatenate(parts, axis=axis)


# ----------------------------- Pallas kernel -------------------------------


def ddnet_kernel(x_ref, adj_ref, w1_ref, w2_ref, wl_ref, bl_ref, w2l_ref, b2l_ref,
                 o_ref):
    """Fused 2-layer GCN + MLP head + log_softmax for one block of Bt samples.

    x_ref  : (Bt*N, in_dim) bf16     adj_ref: (Bt, N, N)  bf16
    w1_ref : (in_dim, hid)  bf16     w2_ref : (hid, hid)  bf16
    wl_ref : (N*hid, half)  bf16     bl_ref : (1, half)   f32
    w2l_ref: (half, out)    bf16     b2l_ref: (1, out)    f32
    o_ref  : (Bt, out)      f32
    """
    bt, n, _ = adj_ref.shape

    # Intermediates stay f32: the wrapper-side bf16 casts are the DMA win, but
    # in-kernel bf16 round-trips only add pack/unpack VALU work (v5e has no
    # bf16 VPU) since intermediates never leave VMEM.
    adj = adj_ref[...].astype(jnp.float32)                                    # (Bt, N, N)

    # --- GCN layer 1: relu(hk @ (x @ W1)) ---
    # Shared-weight matmul over all Bt*N node rows at once (single MXU call).
    s1 = jnp.dot(x_ref[...], w1_ref[...], preferred_element_type=jnp.float32)  # (Bt*N, hid)
    h1 = _cat([
        jnp.maximum(jnp.dot(adj[b], s1[b * n:(b + 1) * n, :],
                            preferred_element_type=jnp.float32), 0.0)
        for b in range(bt)], axis=0)                                          # (Bt*N, hid) f32

    # TODO(synk): F.dropout is identity in eval mode; training-mode dropout and
    # the rdp/rdp2/linrdp mask bookkeeping (module side-state, not outputs) are omitted.

    # --- GCN layer 2: relu(hk @ (h1 @ W2)) ---
    s2 = jnp.dot(h1, w2_ref[...].astype(jnp.float32),
                 preferred_element_type=jnp.float32)                          # (Bt*N, hid)
    h2 = [jnp.maximum(jnp.dot(adj[b], s2[b * n:(b + 1) * n, :],
                              preferred_element_type=jnp.float32), 0.0)
          for b in range(bt)]                                                 # Bt x (N, hid)

    # --- head: z1 = relu(flatten(h2) @ Wl.T + bl) ---
    # flatten(h2)[b, i*hid + j] == h2[b][i, j]; built by lane-concatenating the
    # N node rows (layout-only work), so the head is a single K = N*hid MXU
    # contraction instead of N serial M=1 dots.
    f = _cat([_cat([h2[b][i:i + 1, :] for i in range(n)], axis=1)
              for b in range(bt)], axis=0)                                    # (Bt, N*hid)
    z1 = jnp.dot(f, wl_ref[...].astype(jnp.float32),
                 preferred_element_type=jnp.float32) + bl_ref[...]            # (Bt, half)
    z1 = jnp.maximum(z1, 0.0)

    # --- head: z2 = z1 @ Wl2.T + b2, then log_softmax over classes ---
    z2 = jnp.dot(z1, w2l_ref[...].astype(jnp.float32),
                 preferred_element_type=jnp.float32) + b2l_ref[...]           # (Bt, out)
    m = jnp.max(z2, axis=-1, keepdims=True)
    e = z2 - m
    o_ref[...] = e - jnp.log(jnp.sum(jnp.exp(e), axis=-1, keepdims=True))


# ------------------------------ JAX wrapper --------------------------------


def ddnet_forward(x, hk, params):
    B, N, in_dim = x.shape
    hid = params["gc1_w"].shape[1]
    nh = N * hid
    half = nh // 2
    out_dim = params["lin2_w"].shape[0]

    # Guard the head-layout assumptions (a differently-sized head would
    # otherwise produce wrong-but-correctly-shaped results).
    assert params["lin_w"].shape == (half, nh), params["lin_w"].shape
    assert params["lin_b"].shape == (half,)
    assert params["lin2_w"].shape == (out_dim, half)
    assert params["gc2_w"].shape == (hid, hid)
    assert hk.shape == (B, N, N)

    # Grid policy: merge the batch into (at most) two "parallel" grid steps so
    # per-step overhead is amortized and both v7x TensorCores get work; fall
    # back when shapes don't divide cleanly.
    if B % 2 == 0 and (B // 2) <= 8 and ((B // 2) * N) % 8 == 0:
        grid_b, bt = 2, B // 2
    elif N % 8 == 0 and B > 8:
        grid_b, bt = B, 1
    else:
        grid_b, bt = 1, B                 # every block == full array: always legal
    # TODO(synk): for much larger B, split into more grid steps (grid_b =
    # cdiv(B, bt)) instead of widening bt; for large N, additionally tile the
    # (N*hid, half) lin weight and the (N, N) adjacency with an accumulator
    # scratch (v7x has only 64 MiB VMEM) and drop double-buffering on the
    # constant-index weight blocks.

    # bf16 for every matmul operand streamed from HBM (halves DMA bytes);
    # biases and all in-kernel intermediates stay f32.
    xb = x.reshape(B * N, in_dim).astype(jnp.bfloat16)
    hkb = hk.astype(jnp.bfloat16)
    w1 = params["gc1_w"].astype(jnp.bfloat16)                  # (in_dim, hid)
    w2 = params["gc2_w"].astype(jnp.bfloat16)                  # (hid, hid)
    # torch Linear stores weight as (out, in); kernel consumes (in, out).
    wl = params["lin_w"].T.astype(jnp.bfloat16)                # (N*hid, half)
    bl = params["lin_b"].reshape(1, half).astype(jnp.float32)
    w2l = params["lin2_w"].T.astype(jnp.bfloat16)              # (half, out_dim)
    b2l = params["lin2_b"].reshape(1, out_dim).astype(jnp.float32)

    flops = B * (
        2 * N * in_dim * hid + 2 * N * N * hid                 # GCN layer 1
        + 2 * N * hid * hid + 2 * N * N * hid                  # GCN layer 2
        + 2 * nh * half + 2 * half * out_dim                   # MLP head
    )
    bytes_accessed = (
        xb.size * 2 + hkb.size * 2 + w1.size * 2 + w2.size * 2
        + wl.size * 2 + bl.size * 4 + w2l.size * 2 + b2l.size * 4
        + B * out_dim * 4
    )

    out3 = pl.pallas_call(
        ddnet_kernel,
        out_shape=jax.ShapeDtypeStruct((grid_b, bt, out_dim), jnp.float32),
        grid=(grid_b,),
        in_specs=[
            pl.BlockSpec((bt * N, in_dim), lambda g: (g, 0)),
            pl.BlockSpec((bt, N, N), lambda g: (g, 0, 0)),
            pl.BlockSpec((in_dim, hid), lambda g: (0, 0)),
            pl.BlockSpec((hid, hid), lambda g: (0, 0)),
            pl.BlockSpec((nh, half), lambda g: (0, 0)),
            pl.BlockSpec((1, half), lambda g: (0, 0)),
            pl.BlockSpec((half, out_dim), lambda g: (0, 0)),
            pl.BlockSpec((1, out_dim), lambda g: (0, 0)),
        ],
        out_specs=pl.BlockSpec((None, bt, out_dim), lambda g: (g, 0, 0)),
        compiler_params=pltpu.CompilerParams(
            dimension_semantics=("parallel",),
            vmem_limit_bytes=32 * 1024 * 1024,
        ),
        cost_estimate=pl.CostEstimate(
            flops=flops,
            transcendentals=B * (out_dim + 1),
            bytes_accessed=bytes_accessed,
        ),
    )(xb, hkb, w1, w2, wl, bl, w2l, b2l)

    return out3.reshape(B, out_dim)


# ------------------------------ references ---------------------------------


def ddnet_reference(x, hk, params):
    """Pure-JAX f32 reference mirroring the PyTorch forward (eval mode)."""
    s1 = jnp.einsum("bni,ih->bnh", x, params["gc1_w"])
    h1 = jnp.maximum(jnp.einsum("bij,bjh->bih", hk, s1), 0.0)
    s2 = jnp.einsum("bnh,hk->bnk", h1, params["gc2_w"])
    h2 = jnp.maximum(jnp.einsum("bij,bjk->bik", hk, s2), 0.0)
    f = h2.reshape(x.shape[0], -1)
    z1 = jnp.maximum(f @ params["lin_w"].T + params["lin_b"], 0.0)
    z2 = z1 @ params["lin2_w"].T + params["lin2_b"]
    return jax.nn.log_softmax(z2, axis=1)


def _round_bf16(a):
    return a.astype(jnp.bfloat16).astype(jnp.float32)


def init_params(key, adj_dim, in_dim, hid_dim, out_dim):
    ks = jax.random.split(key, 6)
    nh = adj_dim * hid_dim
    half = nh // 2
    stdv1 = 1.0 / math.sqrt(hid_dim)
    stdv2 = 1.0 / math.sqrt(hid_dim)
    lin_std = 1.0 / math.sqrt(nh)
    lin2_std = 1.0 / math.sqrt(half)
    return {
        "gc1_w": jax.random.uniform(ks[0], (in_dim, hid_dim), jnp.float32, -stdv1, stdv1),
        "gc2_w": jax.random.uniform(ks[1], (hid_dim, hid_dim), jnp.float32, -stdv2, stdv2),
        "lin_w": jax.random.uniform(ks[2], (half, nh), jnp.float32, -lin_std, lin_std),
        "lin_b": jax.random.uniform(ks[3], (half,), jnp.float32, -lin_std, lin_std),
        "lin2_w": jax.random.uniform(ks[4], (out_dim, half), jnp.float32, -lin2_std, lin2_std),
        "lin2_b": jax.random.uniform(ks[5], (out_dim,), jnp.float32, -lin2_std, lin2_std),
    }


if __name__ == "__main__":
    # Small shapes consistent with the module: adj_dim = #nodes; B=4 exercises
    # the batch-merged grid (2 parallel steps x 2 samples each).
    B, N, IN_DIM, HID_DIM, OUT_DIM = 4, 8, 16, 32, 8

    key = jax.random.PRNGKey(0)
    kx, kh, kp = jax.random.split(key, 3)

    x = jax.random.normal(kx, (B, N, IN_DIM), dtype=jnp.float32)
    # heat-kernel-like positive adjacency, symmetrized
    a = jax.random.uniform(kh, (B, N, N), dtype=jnp.float32)
    hk = 0.5 * (a + jnp.transpose(a, (0, 2, 1)))

    params = init_params(kp, N, IN_DIM, HID_DIM, OUT_DIM)

    out = jax.block_until_ready(ddnet_forward(x, hk, params))

    # Matched reference: same bf16 rounding at the HBM boundary, f32 compute.
    params_r = dict(params)
    for k in ("gc1_w", "gc2_w", "lin_w", "lin2_w"):
        params_r[k] = _round_bf16(params[k])
    with jax.default_matmul_precision("float32"):
        ref_matched = jax.block_until_ready(
            ddnet_reference(_round_bf16(x), _round_bf16(hk), params_r))
        ref_f32 = jax.block_until_ready(ddnet_reference(x, hk, params))

    assert out.shape == (B, OUT_DIM)
    # tight check against a reference with identical input rounding
    assert jnp.allclose(out, ref_matched, atol=5e-3, rtol=5e-3), (
        float(jnp.max(jnp.abs(out - ref_matched))))
    # loose check against the full-f32 reference (bf16 matmul inputs only)
    assert jnp.allclose(out, ref_f32, atol=5e-2, rtol=5e-2), (
        float(jnp.max(jnp.abs(out - ref_f32))))
    print("KERNEL_OK")
</pallas_src>

<mosaic_0001>
module attributes {stable_mosaic.version = 11 : i64} {
  func.func @ddnet_kernel(%arg0: i32, %arg1: memref<16x16xbf16, #tpu.memory_space<vmem>>, %arg2: memref<2x8x8xbf16, #tpu.memory_space<vmem>>, %arg3: memref<16x32xbf16, #tpu.memory_space<vmem>>, %arg4: memref<32x32xbf16, #tpu.memory_space<vmem>>, %arg5: memref<256x128xbf16, #tpu.memory_space<vmem>>, %arg6: memref<1x128xf32, #tpu.memory_space<vmem>>, %arg7: memref<128x8xbf16, #tpu.memory_space<vmem>>, %arg8: memref<1x8xf32, #tpu.memory_space<vmem>>, %arg9: memref<1x2x8xf32, #tpu.memory_space<vmem>>) attributes {dimension_semantics = [#tpu.dimension_semantics<parallel>], iteration_bounds = array<i64: 2>, scalar_prefetch = 0 : i64, scratch_operands = 0 : i64, tpu.core_type = #tpu.core_type<tc>, window_params = [{transform_indices = @transform_0, window_bounds = array<i64: 16, 16>}, {transform_indices = @transform_1, window_bounds = array<i64: 2, 8, 8>}, {pipeline_mode = #tpu.pipeline_mode<synchronous>, transform_indices = @transform_2, window_bounds = array<i64: 16, 32>}, {pipeline_mode = #tpu.pipeline_mode<synchronous>, transform_indices = @transform_3, window_bounds = array<i64: 32, 32>}, {pipeline_mode = #tpu.pipeline_mode<synchronous>, transform_indices = @transform_4, window_bounds = array<i64: 256, 128>}, {pipeline_mode = #tpu.pipeline_mode<synchronous>, transform_indices = @transform_5, window_bounds = array<i64: 1, 128>}, {pipeline_mode = #tpu.pipeline_mode<synchronous>, transform_indices = @transform_6, window_bounds = array<i64: 128, 8>}, {pipeline_mode = #tpu.pipeline_mode<synchronous>, transform_indices = @transform_7, window_bounds = array<i64: 1, 8>}, {transform_indices = @transform_8, window_bounds = array<i64: 1, 2, 8>}]} {
    %c0 = arith.constant 0 : index
    %c0_0 = arith.constant 0 : index
    %c0_1 = arith.constant 0 : index
    %0 = vector.load %arg2[%c0, %c0_0, %c0_1] : memref<2x8x8xbf16, #tpu.memory_space<vmem>>, vector<2x8x8xbf16>
    %1 = arith.extf %0 : vector<2x8x8xbf16> to vector<2x8x8xf32>
    %c0_2 = arith.constant 0 : index
    %c0_3 = arith.constant 0 : index
    %2 = vector.load %arg1[%c0_2, %c0_3] : memref<16x16xbf16, #tpu.memory_space<vmem>>, vector<16x16xbf16>
    %c0_4 = arith.constant 0 : index
    %c0_5 = arith.constant 0 : index
    %3 = vector.load %arg3[%c0_4, %c0_5] : memref<16x32xbf16, #tpu.memory_space<vmem>>, vector<16x32xbf16>
    %cst = arith.constant dense<0.000000e+00> : vector<16x32xf32>
    %4 = tpu.matmul %2, %3, %cst {dimension_numbers = #tpu.dot_dimension_numbers<[1], [0], [0], [1], [0, 0, 1, 1], [], []>} : vector<16x16xbf16>, vector<16x32xbf16>, vector<16x32xf32> -> vector<16x32xf32>
    %5 = vector.extract_strided_slice %1 {offsets = [0, 0, 0], sizes = [1, 8, 8], strides = [1, 1, 1]} : vector<2x8x8xf32> to vector<1x8x8xf32>
    %6 = vector.shape_cast %5 : vector<1x8x8xf32> to vector<8x8xf32>
    %7 = vector.extract_strided_slice %4 {offsets = [0, 0], sizes = [8, 32], strides = [1, 1]} : vector<16x32xf32> to vector<8x32xf32>
    %cst_6 = arith.constant dense<0.000000e+00> : vector<8x32xf32>
    %8 = tpu.matmul %6, %7, %cst_6 {dimension_numbers = #tpu.dot_dimension_numbers<[1], [0], [0], [1], [0, 0, 1, 1], [], []>} : vector<8x8xf32>, vector<8x32xf32>, vector<8x32xf32> -> vector<8x32xf32>
    %cst_7 = arith.constant 0.000000e+00 : f32
    %9 = vector.broadcast %cst_7 : f32 to vector<8x32xf32>
    %10 = arith.maximumf %8, %9 : vector<8x32xf32>
    %11 = vector.extract_strided_slice %1 {offsets = [1, 0, 0], sizes = [1, 8, 8], strides = [1, 1, 1]} : vector<2x8x8xf32> to vector<1x8x8xf32>
    %12 = vector.shape_cast %11 : vector<1x8x8xf32> to vector<8x8xf32>
    %13 = vector.extract_strided_slice %4 {offsets = [8, 0], sizes = [8, 32], strides = [1, 1]} : vector<16x32xf32> to vector<8x32xf32>
    %cst_8 = arith.constant dense<0.000000e+00> : vector<8x32xf32>
    %14 = tpu.matmul %12, %13, %cst_8 {dimension_numbers = #tpu.dot_dimension_numbers<[1], [0], [0], [1], [0, 0, 1, 1], [], []>} : vector<8x8xf32>, vector<8x32xf32>, vector<8x32xf32> -> vector<8x32xf32>
    %cst_9 = arith.constant 0.000000e+00 : f32
    %15 = vector.broadcast %cst_9 : f32 to vector<8x32xf32>
    %16 = arith.maximumf %14, %15 : vector<8x32xf32>
    %17 = tpu.concatenate %10, %16 in 0 : vector<8x32xf32>, vector<8x32xf32> -> vector<16x32xf32>
    %c0_10 = arith.constant 0 : index
    %c0_11 = arith.constant 0 : index
    %18 = vector.load %arg4[%c0_10, %c0_11] : memref<32x32xbf16, #tpu.memory_space<vmem>>, vector<32x32xbf16>
    %19 = arith.extf %18 : vector<32x32xbf16> to vector<32x32xf32>
    %cst_12 = arith.constant dense<0.000000e+00> : vector<16x32xf32>
    %20 = tpu.matmul %17, %19, %cst_12 {dimension_numbers = #tpu.dot_dimension_numbers<[1], [0], [0], [1], [0, 0, 1, 1], [], []>} : vector<16x32xf32>, vector<32x32xf32>, vector<16x32xf32> -> vector<16x32xf32>
    %21 = vector.extract_strided_slice %1 {offsets = [0, 0, 0], sizes = [1, 8, 8], strides = [1, 1, 1]} : vector<2x8x8xf32> to vector<1x8x8xf32>
    %22 = vector.shape_cast %21 : vector<1x8x8xf32> to vector<8x8xf32>
    %23 = vector.extract_strided_slice %20 {offsets = [0, 0], sizes = [8, 32], strides = [1, 1]} : vector<16x32xf32> to vector<8x32xf32>
    %cst_13 = arith.constant dense<0.000000e+00> : vector<8x32xf32>
    %24 = tpu.matmul %22, %23, %cst_13 {dimension_numbers = #tpu.dot_dimension_numbers<[1], [0], [0], [1], [0, 0, 1, 1], [], []>} : vector<8x8xf32>, vector<8x32xf32>, vector<8x32xf32> -> vector<8x32xf32>
    %cst_14 = arith.constant 0.000000e+00 : f32
    %25 = vector.broadcast %cst_14 : f32 to vector<8x32xf32>
    %26 = arith.maximumf %24, %25 : vector<8x32xf32>
    %27 = vector.extract_strided_slice %1 {offsets = [1, 0, 0], sizes = [1, 8, 8], strides = [1, 1, 1]} : vector<2x8x8xf32> to vector<1x8x8xf32>
    %28 = vector.shape_cast %27 : vector<1x8x8xf32> to vector<8x8xf32>
    %29 = vector.extract_strided_slice %20 {offsets = [8, 0], sizes = [8, 32], strides = [1, 1]} : vector<16x32xf32> to vector<8x32xf32>
    %cst_15 = arith.constant dense<0.000000e+00> : vector<8x32xf32>
    %30 = tpu.matmul %28, %29, %cst_15 {dimension_numbers = #tpu.dot_dimension_numbers<[1], [0], [0], [1], [0, 0, 1, 1], [], []>} : vector<8x8xf32>, vector<8x32xf32>, vector<8x32xf32> -> vector<8x32xf32>
    %cst_16 = arith.constant 0.000000e+00 : f32
    %31 = vector.broadcast %cst_16 : f32 to vector<8x32xf32>
    %32 = arith.maximumf %30, %31 : vector<8x32xf32>
    %33 = vector.extract_strided_slice %26 {offsets = [0, 0], sizes = [1, 32], strides = [1, 1]} : vector<8x32xf32> to vector<1x32xf32>
    %34 = vector.extract_strided_slice %26 {offsets = [1, 0], sizes = [1, 32], strides = [1, 1]} : vector<8x32xf32> to vector<1x32xf32>
    %35 = vector.extract_strided_slice %26 {offsets = [2, 0], sizes = [1, 32], strides = [1, 1]} : vector<8x32xf32> to vector<1x32xf32>
    %36 = vector.extract_strided_slice %26 {offsets = [3, 0], sizes = [1, 32], strides = [1, 1]} : vector<8x32xf32> to vector<1x32xf32>
    %37 = vector.extract_strided_slice %26 {offsets = [4, 0], sizes = [1, 32], strides = [1, 1]} : vector<8x32xf32> to vector<1x32xf32>
    %38 = vector.extract_strided_slice %26 {offsets = [5, 0], sizes = [1, 32], strides = [1, 1]} : vector<8x32xf32> to vector<1x32xf32>
    %39 = vector.extract_strided_slice %26 {offsets = [6, 0], sizes = [1, 32], strides = [1, 1]} : vector<8x32xf32> to vector<1x32xf32>
    %40 = vector.extract_strided_slice %26 {offsets = [7, 0], sizes = [1, 32], strides = [1, 1]} : vector<8x32xf32> to vector<1x32xf32>
    %41 = tpu.concatenate %33, %34, %35, %36, %37, %38, %39, %40 in 1 : vector<1x32xf32>, vector<1x32xf32>, vector<1x32xf32>, vector<1x32xf32>, vector<1x32xf32>, vector<1x32xf32>, vector<1x32xf32>, vector<1x32xf32> -> vector<1x256xf32>
    %42 = vector.extract_strided_slice %32 {offsets = [0, 0], sizes = [1, 32], strides = [1, 1]} : vector<8x32xf32> to vector<1x32xf32>
    %43 = vector.extract_strided_slice %32 {offsets = [1, 0], sizes = [1, 32], strides = [1, 1]} : vector<8x32xf32> to vector<1x32xf32>
    %44 = vector.extract_strided_slice %32 {offsets = [2, 0], sizes = [1, 32], strides = [1, 1]} : vector<8x32xf32> to vector<1x32xf32>
    %45 = vector.extract_strided_slice %32 {offsets = [3, 0], sizes = [1, 32], strides = [1, 1]} : vector<8x32xf32> to vector<1x32xf32>
    %46 = vector.extract_strided_slice %32 {offsets = [4, 0], sizes = [1, 32], strides = [1, 1]} : vector<8x32xf32> to vector<1x32xf32>
    %47 = vector.extract_strided_slice %32 {offsets = [5, 0], sizes = [1, 32], strides = [1, 1]} : vector<8x32xf32> to vector<1x32xf32>
    %48 = vector.extract_strided_slice %32 {offsets = [6, 0], sizes = [1, 32], strides = [1, 1]} : vector<8x32xf32> to vector<1x32xf32>
    %49 = vector.extract_strided_slice %32 {offsets = [7, 0], sizes = [1, 32], strides = [1, 1]} : vector<8x32xf32> to vector<1x32xf32>
    %50 = tpu.concatenate %42, %43, %44, %45, %46, %47, %48, %49 in 1 : vector<1x32xf32>, vector<1x32xf32>, vector<1x32xf32>, vector<1x32xf32>, vector<1x32xf32>, vector<1x32xf32>, vector<1x32xf32>, vector<1x32xf32> -> vector<1x256xf32>
    %51 = tpu.concatenate %41, %50 in 0 : vector<1x256xf32>, vector<1x256xf32> -> vector<2x256xf32>
    %c0_17 = arith.constant 0 : index
    %c0_18 = arith.constant 0 : index
    %52 = vector.load %arg5[%c0_17, %c0_18] : memref<256x128xbf16, #tpu.memory_space<vmem>>, vector<256x128xbf16>
    %53 = arith.extf %52 : vector<256x128xbf16> to vector<256x128xf32>
    %cst_19 = arith.constant dense<0.000000e+00> : vector<2x128xf32>
    %54 = tpu.matmul %51, %53, %cst_19 {dimension_numbers = #tpu.dot_dimension_numbers<[1], [0], [0], [1], [0, 0, 1, 1], [], []>} : vector<2x256xf32>, vector<256x128xf32>, vector<2x128xf32> -> vector<2x128xf32>
    %c0_20 = arith.constant 0 : index
    %c0_21 = arith.constant 0 : index
    %55 = vector.load %arg6[%c0_20, %c0_21] : memref<1x128xf32, #tpu.memory_space<vmem>>, vector<1x128xf32>
    %56 = vector.broadcast %55 : vector<1x128xf32> to vector<2x128xf32>
    %57 = arith.addf %54, %56 : vector<2x128xf32>
    %cst_22 = arith.constant 0.000000e+00 : f32
    %58 = vector.broadcast %cst_22 : f32 to vector<2x128xf32>
    %59 = arith.maximumf %57, %58 : vector<2x128xf32>
    %c0_23 = arith.constant 0 : index
    %c0_24 = arith.constant 0 : index
    %60 = vector.load %arg7[%c0_23, %c0_24] : memref<128x8xbf16, #tpu.memory_space<vmem>>, vector<128x8xbf16>
    %61 = arith.extf %60 : vector<128x8xbf16> to vector<128x8xf32>
    %cst_25 = arith.constant dense<0.000000e+00> : vector<2x8xf32>
    %62 = tpu.matmul %59, %61, %cst_25 {dimension_numbers = #tpu.dot_dimension_numbers<[1], [0], [0], [1], [0, 0, 1, 1], [], []>} : vector<2x128xf32>, vector<128x8xf32>, vector<2x8xf32> -> vector<2x8xf32>
    %c0_26 = arith.constant 0 : index
    %c0_27 = arith.constant 0 : index
    %63 = vector.load %arg8[%c0_26, %c0_27] : memref<1x8xf32, #tpu.memory_space<vmem>>, vector<1x8xf32>
    %64 = vector.broadcast %63 : vector<1x8xf32> to vector<2x8xf32>
    %65 = arith.addf %62, %64 : vector<2x8xf32>
    %cst_28 = arith.constant dense<0xFF800000> : vector<2xf32>
    %66 = vector.multi_reduction <maximumf>, %65, %cst_28 [1] : vector<2x8xf32> to vector<2xf32>
    %67 = vector.shape_cast %66 : vector<2xf32> to vector<2x1xf32>
    %68 = vector.broadcast %67 : vector<2x1xf32> to vector<2x8xf32>
    %69 = arith.subf %65, %68 : vector<2x8xf32>
    %70 = math.exp %69 : vector<2x8xf32>
    %cst_29 = arith.constant dense<0.000000e+00> : vector<2xf32>
    %71 = vector.multi_reduction <add>, %70, %cst_29 [1] : vector<2x8xf32> to vector<2xf32>
    %72 = vector.shape_cast %71 : vector<2xf32> to vector<2x1xf32>
    %73 = math.log %72 : vector<2x1xf32>
    %74 = vector.broadcast %73 : vector<2x1xf32> to vector<2x8xf32>
    %75 = arith.subf %69, %74 : vector<2x8xf32>
    %c0_30 = arith.constant 0 : index
    %c0_31 = arith.constant 0 : index
    %c0_32 = arith.constant 0 : index
    %76 = vector.load %arg9[%c0_30, %c0_31, %c0_32] : memref<1x2x8xf32, #tpu.memory_space<vmem>>, vector<1x2x8xf32>
    %77 = vector.shape_cast %76 : vector<1x2x8xf32> to vector<2x8xf32>
    %78 = vector.shape_cast %75 : vector<2x8xf32> to vector<1x2x8xf32>
    tpu.vector_store %arg9[%c0_30, %c0_31, %c0_32], %78 {strides = array<i32>} : memref<1x2x8xf32, #tpu.memory_space<vmem>>, vector<1x2x8xf32>,
    return
  }
  func.func @transform_0(%arg0: i32) -> (i32, i32) {
    %c0_i32 = arith.constant 0 : i32
    %c0_i32_0 = arith.constant 0 : i32
    return %arg0, %c0_i32 : i32, i32
  }
  func.func @transform_1(%arg0: i32) -> (i32, i32, i32) {
    %c0_i32 = arith.constant 0 : i32
    %c0_i32_0 = arith.constant 0 : i32
    %c0_i32_1 = arith.constant 0 : i32
    return %arg0, %c0_i32, %c0_i32_0 : i32, i32, i32
  }
  func.func @transform_2(%arg0: i32) -> (i32, i32) {
    %c0_i32 = arith.constant 0 : i32
    %c0_i32_0 = arith.constant 0 : i32
    %c0_i32_1 = arith.constant 0 : i32
    return %c0_i32, %c0_i32_0 : i32, i32
  }
  func.func @transform_3(%arg0: i32) -> (i32, i32) {
    %c0_i32 = arith.constant 0 : i32
    %c0_i32_0 = arith.constant 0 : i32
    %c0_i32_1 = arith.constant 0 : i32
    return %c0_i32, %c0_i32_0 : i32, i32
  }
  func.func @transform_4(%arg0: i32) -> (i32, i32) {
    %c0_i32 = arith.constant 0 : i32
    %c0_i32_0 = arith.constant 0 : i32
    %c0_i32_1 = arith.constant 0 : i32
    return %c0_i32, %c0_i32_0 : i32, i32
  }
  func.func @transform_5(%arg0: i32) -> (i32, i32) {
    %c0_i32 = arith.constant 0 : i32
    %c0_i32_0 = arith.constant 0 : i32
    %c0_i32_1 = arith.constant 0 : i32
    return %c0_i32, %c0_i32_0 : i32, i32
  }
  func.func @transform_6(%arg0: i32) -> (i32, i32) {
    %c0_i32 = arith.constant 0 : i32
    %c0_i32_0 = arith.constant 0 : i32
    %c0_i32_1 = arith.constant 0 : i32
    return %c0_i32, %c0_i32_0 : i32, i32
  }
  func.func @transform_7(%arg0: i32) -> (i32, i32) {
    %c0_i32 = arith.constant 0 : i32
    %c0_i32_0 = arith.constant 0 : i32
    %c0_i32_1 = arith.constant 0 : i32
    return %c0_i32, %c0_i32_0 : i32, i32
  }
  func.func @transform_8(%arg0: i32) -> (i32, i32, i32) {
    %c0_i32 = arith.constant 0 : i32
    %c0_i32_0 = arith.constant 0 : i32
    %c0_i32_1 = arith.constant 0 : i32
    return %arg0, %c0_i32, %c0_i32_0 : i32, i32, i32
  }
}

</mosaic_0001>

<llo_original>
// kernel: tpu_custom_call.1
$region0: #{tpu_custom_call.1}
  #allocation0 [shape = 'u32[]', space=smem, size = 0x4, offset = 0x4, fixed_abs, tag = 'smem constant byte address 0x4 - core index']
  #allocation1 [shape = 'u32[144,128]{1,0:T(1,128)}', space=vmem, size = 0x12000, scoped, tag = 'internal scratch']
  %s0 = inlined_call_operand.vmem [shape: bf16[32,16], index: 0, kind: input, shape index: {}]
  %s1 = inlined_call_operand.vmem [shape: bf16[4,8,8], index: 1, kind: input, shape index: {}]
  %s2 = inlined_call_operand.vmem [shape: bf16[16,32], index: 2, kind: input, shape index: {}]
  %s3 = inlined_call_operand.vmem [shape: bf16[32,32], index: 3, kind: input, shape index: {}]
  %s4 = inlined_call_operand.hbm [shape: bf16[256,128], index: 4, kind: input, shape index: {}]
  %s5 = inlined_call_operand.vmem [shape: f32[1,128], index: 5, kind: input, shape index: {}]
  %s6 = inlined_call_operand.vmem [shape: bf16[128,8], index: 6, kind: input, shape index: {}]
  %s7 = inlined_call_operand.vmem [shape: f32[1,8], index: 7, kind: input, shape index: {}]
  %s8 = inlined_call_operand.hbm [shape: f32[2,2,8], index: 8, kind: output, shape index: {}]
  %s9 = sld [smem:[#allocation0]]
  $region69: #{tpu_custom_call.1} parent=0
    _
  %s11 = ssub.s32 1, %s9
  %s12 = scalar_select 0, %s11, %s9
  $region1: #{tpu_custom_call.1} parent=0
    #allocation2 [shape = 'u8[65536]{0}', space=vmem, size = 0x10000, scoped, tag = 'input window, operand 4, single buffered']
    #allocation3 [shape = 's32[2]{0}', space=sflag, size = 0x8, scoped, tag = 'scoped memory for tpu_custom_call.1']
    #allocation4 [shape = 's32[2]{0}', space=sflag, size = 0x8, scoped, tag = 'scoped memory for tpu_custom_call.1']
    #allocation5 [shape = 'u8[2048]{0}', space=vmem, size = 0x800, scoped, tag = 'output window, operand 0']
    %13 = vsyncpa [#allocation3], 0
    %14 = vsyncpa [#allocation4], 0
    %s15 = scalar_lea.sflag [#allocation4], 1
    %16 = vsyncpa %s15, 0
    loop: start=0, step=1, limit=4
    $region2: #{tpu_custom_call.1} parent=1 // loop_pre_header
      _
    $region3: #{tpu_custom_call.1} parent=1 // loop_header
      %s18 = sphi 0, %s22
      %p19 = scmp.ge.s32.totalorder %s18, 4
      %s28 = sphi 0, %s30
      %s31 = sphi 0, %s28
      %s32 = sphi 0, %s31
      %s48 = sphi 0, %s32
      %s54 = sphi 0, %s56
      %s57 = sphi 0, %s54
      %s58 = sphi 0, %s57
      %s74 = sphi 0, %s58
      %s78 = sphi 0, %s78
      %s80 = sphi 0, %s78
      %s81 = sphi 0, %s80
      %s95 = sphi 0, %s81
      %s99 = sphi 0, %s99
      %s101 = sphi 0, %s99
      %s102 = sphi 0, %s101
      %s116 = sphi 0, %s102
      %s120 = sphi 0, %s120
      %s122 = sphi 0, %s120
      %s123 = sphi 0, %s122
      %s137 = sphi 0, %s123
      %s141 = sphi 0, %s141
      %s143 = sphi 0, %s141
      %s144 = sphi 0, %s143
      %s158 = sphi 0, %s144
      %s162 = sphi 0, %s162
      %s164 = sphi 0, %s162
      %s165 = sphi 0, %s164
      %s179 = sphi 0, %s165
      %s183 = sphi 0, %s183
      %s185 = sphi 0, %s183
      %s186 = sphi 0, %s185
      %s200 = sphi 0, %s186
      %s206 = sphi 0, %s208
      %s209 = sphi 0, %s206
      %s210 = sphi 0, %s209
      %s226 = sphi 0, %s210
    $region4: #{tpu_custom_call.1} parent=1 // loop_header_branch
      %21 = sbr.rel (%p19) target = $region8
    $region5: #{tpu_custom_call.1} parent=1 // loop_body
      %s23 = ssub.s32 %s18, 1
      %s24 = ssub.s32 %s18, 2
      %s25 = sadd.s32 %s18, 1
      %s26 = ssub.s32 %s18, %s25
      %p27 = scmp.eq.s32.totalorder %s26, 0
      %s29 = sadd.s32 %s28, 1
      %s30 = scalar_select %p27, %s28, %s29
      %p33 = pneg %p27
      %p34 = scmp.eq.s32.totalorder %s18, 1
      %p35 = por %p33, %p34
      %p36 = scmp.ne.s32.totalorder %s28, %s31
      %p37 = scmp.eq.s32.totalorder %s18, 0
      %p38 = por %p36, %p37
      %p39 = scmp.ne.s32.totalorder %s28, %s31
      %p40 = scmp.eq.s32.totalorder %s23, 1
      %p41 = por %p39, %p40
      %p42 = scmp.ne.s32.totalorder %s31, %s32
      %p43 = scmp.eq.s32.totalorder %s23, 0
      %p44 = por %p42, %p43
      %p45 = scmp.ne.s32.totalorder %s31, %s32
      %p46 = scmp.eq.s32.totalorder %s24, 1
      %p47 = por %p45, %p46
      %p49 = scmp.ne.s32.totalorder %s32, %s48
      %p50 = scmp.eq.s32.totalorder %s24, 0
      %p51 = por %p49, %p50
      %s52 = ssub.s32 %s18, %s25
      %p53 = scmp.eq.s32.totalorder %s52, 0
      %s55 = sadd.s32 %s54, 1
      %s56 = scalar_select %p53, %s54, %s55
      %p59 = pneg %p53
      %p60 = scmp.eq.s32.totalorder %s18, 1
      %p61 = por %p59, %p60
      %p62 = scmp.ne.s32.totalorder %s54, %s57
      %p63 = scmp.eq.s32.totalorder %s18, 0
      %p64 = por %p62, %p63
      %p65 = scmp.ne.s32.totalorder %s54, %s57
      %p66 = scmp.eq.s32.totalorder %s23, 1
      %p67 = por %p65, %p66
      %p68 = scmp.ne.s32.totalorder %s57, %s58
      %p69 = scmp.eq.s32.totalorder %s23, 0
      %p70 = por %p68, %p69
      %p71 = scmp.ne.s32.totalorder %s57, %s58
      %p72 = scmp.eq.s32.totalorder %s24, 1
      %p73 = por %p71, %p72
      %p75 = scmp.ne.s32.totalorder %s58, %s74
      %p76 = scmp.eq.s32.totalorder %s24, 0
      %p77 = por %p75, %p76
      %s79 = sadd.s32 %s78, 1
      %p82 = scmp.eq.s32.totalorder %s18, 1
      %p83 = scmp.ne.s32.totalorder %s78, %s80
      %p84 = scmp.eq.s32.totalorder %s18, 0
      %p85 = por %p83, %p84
      %p86 = scmp.ne.s32.totalorder %s78, %s80
      %p87 = scmp.eq.s32.totalorder %s23, 1
      %p88 = por %p86, %p87
      %p89 = scmp.ne.s32.totalorder %s80, %s81
      %p90 = scmp.eq.s32.totalorder %s23, 0
      %p91 = por %p89, %p90
      %p92 = scmp.ne.s32.totalorder %s80, %s81
      %p93 = scmp.eq.s32.totalorder %s24, 1
      %p94 = por %p92, %p93
      %p96 = scmp.ne.s32.totalorder %s81, %s95
      %p97 = scmp.eq.s32.totalorder %s24, 0
      %p98 = por %p96, %p97
      %s100 = sadd.s32 %s99, 1
      %p103 = scmp.eq.s32.totalorder %s18, 1
      %p104 = scmp.ne.s32.totalorder %s99, %s101
      %p105 = scmp.eq.s32.totalorder %s18, 0
      %p106 = por %p104, %p105
      %p107 = scmp.ne.s32.totalorder %s99, %s101
      %p108 = scmp.eq.s32.totalorder %s23, 1
      %p109 = por %p107, %p108
      %p110 = scmp.ne.s32.totalorder %s101, %s102
      %p111 = scmp.eq.s32.totalorder %s23, 0
      %p112 = por %p110, %p111
      %p113 = scmp.ne.s32.totalorder %s101, %s102
      %p114 = scmp.eq.s32.totalorder %s24, 1
      %p115 = por %p113, %p114
      %p117 = scmp.ne.s32.totalorder %s102, %s116
      %p118 = scmp.eq.s32.totalorder %s24, 0
      %p119 = por %p117, %p118
      %s121 = sadd.s32 %s120, 1
      %p124 = scmp.eq.s32.totalorder %s18, 1
      %p125 = scmp.ne.s32.totalorder %s120, %s122
      %p126 = scmp.eq.s32.totalorder %s18, 0
      %p127 = por %p125, %p126
      %p128 = scmp.ne.s32.totalorder %s120, %s122
      %p129 = scmp.eq.s32.totalorder %s23, 1
      %p130 = por %p128, %p129
      %p131 = scmp.ne.s32.totalorder %s122, %s123
      %p132 = scmp.eq.s32.totalorder %s23, 0
      %p133 = por %p131, %p132
      %p134 = scmp.ne.s32.totalorder %s122, %s123
      %p135 = scmp.eq.s32.totalorder %s24, 1
      %p136 = por %p134, %p135
      %p138 = scmp.ne.s32.totalorder %s123, %s137
      %p139 = scmp.eq.s32.totalorder %s24, 0
      %p140 = por %p138, %p139
      %s142 = sadd.s32 %s141, 1
      %p145 = scmp.eq.s32.totalorder %s18, 1
      %p146 = scmp.ne.s32.totalorder %s141, %s143
      %p147 = scmp.eq.s32.totalorder %s18, 0
      %p148 = por %p146, %p147
      %p149 = scmp.ne.s32.totalorder %s141, %s143
      %p150 = scmp.eq.s32.totalorder %s23, 1
      %p151 = por %p149, %p150
      %p152 = scmp.ne.s32.totalorder %s143, %s144
      %p153 = scmp.eq.s32.totalorder %s23, 0
      %p154 = por %p152, %p153
      %p155 = scmp.ne.s32.totalorder %s143, %s144
      %p156 = scmp.eq.s32.totalorder %s24, 1
      %p157 = por %p155, %p156
      %p159 = scmp.ne.s32.totalorder %s144, %s158
      %p160 = scmp.eq.s32.totalorder %s24, 0
      %p161 = por %p159, %p160
      %s163 = sadd.s32 %s162, 1
      %p166 = scmp.eq.s32.totalorder %s18, 1
      %p167 = scmp.ne.s32.totalorder %s162, %s164
      %p168 = scmp.eq.s32.totalorder %s18, 0
      %p169 = por %p167, %p168
      %p170 = scmp.ne.s32.totalorder %s162, %s164
      %p171 = scmp.eq.s32.totalorder %s23, 1
      %p172 = por %p170, %p171
      %p173 = scmp.ne.s32.totalorder %s164, %s165
      %p174 = scmp.eq.s32.totalorder %s23, 0
      %p175 = por %p173, %p174
      %p176 = scmp.ne.s32.totalorder %s164, %s165
      %p177 = scmp.eq.s32.totalorder %s24, 1
      %p178 = por %p176, %p177
      %p180 = scmp.ne.s32.totalorder %s165, %s179
      %p181 = scmp.eq.s32.totalorder %s24, 0
      %p182 = por %p180, %p181
      %s184 = sadd.s32 %s183, 1
      %p187 = scmp.eq.s32.totalorder %s18, 1
      %p188 = scmp.ne.s32.totalorder %s183, %s185
      %p189 = scmp.eq.s32.totalorder %s18, 0
      %p190 = por %p188, %p189
      %p191 = scmp.ne.s32.totalorder %s183, %s185
      %p192 = scmp.eq.s32.totalorder %s23, 1
      %p193 = por %p191, %p192
      %p194 = scmp.ne.s32.totalorder %s185, %s186
      %p195 = scmp.eq.s32.totalorder %s23, 0
      %p196 = por %p194, %p195
      %p197 = scmp.ne.s32.totalorder %s185, %s186
      %p198 = scmp.eq.s32.totalorder %s24, 1
      %p199 = por %p197, %p198
      %p201 = scmp.ne.s32.totalorder %s186, %s200
      %p202 = scmp.eq.s32.totalorder %s24, 0
      %p203 = por %p201, %p202
      %s204 = ssub.s32 %s18, %s25
      %p205 = scmp.eq.s32.totalorder %s204, 0
      %s207 = sadd.s32 %s206, 1
      %s208 = scalar_select %p205, %s206, %s207
      %p211 = pneg %p205
      %p212 = scmp.eq.s32.totalorder %s18, 1
      %p213 = por %p211, %p212
      %p214 = scmp.ne.s32.totalorder %s206, %s209
      %p215 = scmp.eq.s32.totalorder %s18, 0
      %p216 = por %p214, %p215
      %p217 = scmp.ne.s32.totalorder %s206, %s209
      %p218 = scmp.eq.s32.totalorder %s23, 1
      %p219 = por %p217, %p218
      %p220 = scmp.ne.s32.totalorder %s209, %s210
      %p221 = scmp.eq.s32.totalorder %s23, 0
      %p222 = por %p220, %p221
      %p223 = scmp.ne.s32.totalorder %s209, %s210
      %p224 = scmp.eq.s32.totalorder %s24, 1
      %p225 = por %p223, %p224
      %p227 = scmp.ne.s32.totalorder %s210, %s226
      %p228 = scmp.eq.s32.totalorder %s24, 0
      %p229 = por %p227, %p228
      %p230 = scmp.le.s32.totalorder 1, %s18
      %p231 = scmp.lt.s32.totalorder %s18, 3
      %p232 = pnand %p230, %p231
      %p233 = pneg %p232
      // Predicated region
      $region9: #{tpu_custom_call.1} parent=5 // pred_check
        _
      $region10: #{tpu_custom_call.1} parent=5 // pred_check_branch
        %235 = sbr.rel (%p232) target = $region12
      $region11: #{tpu_custom_call.1} parent=5 // pred_region
        %s236 = ssub.s32 %s18, 1
        // Predicated region
        $region13: #{tpu_custom_call.1} parent=11 // pred_check
          %p237 = pneg %p91
        $region14: #{tpu_custom_call.1} parent=11 // pred_check_branch
          %239 = sbr.rel (%p237) target = $region16
        $region15: #{tpu_custom_call.1} parent=11 // pred_region
          _
        $region16: #{tpu_custom_call.1} parent=11 // pred_fallthru
          _
        // Predicated region
        $region17: #{tpu_custom_call.1} parent=11 // pred_check
          %p240 = pneg %p112
        $region18: #{tpu_custom_call.1} parent=11 // pred_check_branch
          %242 = sbr.rel (%p240) target = $region20
        $region19: #{tpu_custom_call.1} parent=11 // pred_region
          _
        $region20: #{tpu_custom_call.1} parent=11 // pred_fallthru
          _
        // Predicated region
        $region21: #{tpu_custom_call.1} parent=11 // pred_check
          %p243 = pneg %p133
        $region22: #{tpu_custom_call.1} parent=11 // pred_check_branch
          %245 = sbr.rel (%p243) target = $region24
        $region23: #{tpu_custom_call.1} parent=11 // pred_region
          %s247 = ssub.s32 2048, 2048
          %248 = vsyncadd [#allocation3], %s247
          %s249 = sshll.u32 [#allocation2], 4
          %s250 = int_to_ptr.vmem [resolvable:$true] %s249
          %255 = dma.hbm_to_vmem [thread:$0]  %s4, 2048, %s250, [#allocation3], 64, 64, 4
        $region24: #{tpu_custom_call.1} parent=11 // pred_fallthru
          _
        // Predicated region
        $region25: #{tpu_custom_call.1} parent=11 // pred_check
          %p256 = pneg %p154
        $region26: #{tpu_custom_call.1} parent=11 // pred_check_branch
          %258 = sbr.rel (%p256) target = $region28
        $region27: #{tpu_custom_call.1} parent=11 // pred_region
          _
        $region28: #{tpu_custom_call.1} parent=11 // pred_fallthru
          _
        // Predicated region
        $region29: #{tpu_custom_call.1} parent=11 // pred_check
          %p259 = pneg %p175
        $region30: #{tpu_custom_call.1} parent=11 // pred_check_branch
          %261 = sbr.rel (%p259) target = $region32
        $region31: #{tpu_custom_call.1} parent=11 // pred_region
          _
        $region32: #{tpu_custom_call.1} parent=11 // pred_fallthru
          _
        // Predicated region
        $region33: #{tpu_custom_call.1} parent=11 // pred_check
          %p262 = pneg %p196
        $region34: #{tpu_custom_call.1} parent=11 // pred_check_branch
          %264 = sbr.rel (%p262) target = $region36
        $region35: #{tpu_custom_call.1} parent=11 // pred_region
          _
        $region36: #{tpu_custom_call.1} parent=11 // pred_fallthru
          _
      $region12: #{tpu_custom_call.1} parent=5 // pred_fallthru
        _
      %p265 = scmp.lt.s32.totalorder %s18, 2
      // Predicated region
      $region37: #{tpu_custom_call.1} parent=5 // pred_check
        %p266 = pneg %p265
      $region38: #{tpu_custom_call.1} parent=5 // pred_check_branch
        %268 = sbr.rel (%p266) target = $region40
      $region39: #{tpu_custom_call.1} parent=5 // pred_region
        // Predicated region
        $region41: #{tpu_custom_call.1} parent=39 // pred_check
          %p269 = pneg %p38
        $region42: #{tpu_custom_call.1} parent=39 // pred_check_branch
          %271 = sbr.rel (%p269) target = $region44
        $region43: #{tpu_custom_call.1} parent=39 // pred_region
          %s272 = smul.u32 2, %s18
          %p273 = scmp.lt.s32.totalorder %s272, 3
          %s274 = scalar_select %p273, %s272, 3
          %s275 = smul.addr %s274, 4
          %s276 = scalar_lea.vmem %s0, %s275
          %s277 = smul.u32 2, %s18
        $region44: #{tpu_custom_call.1} parent=39 // pred_fallthru
          _
        // Predicated region
        $region45: #{tpu_custom_call.1} parent=39 // pred_check
          %p278 = pneg %p64
        $region46: #{tpu_custom_call.1} parent=39 // pred_check_branch
          %280 = sbr.rel (%p278) target = $region48
        $region47: #{tpu_custom_call.1} parent=39 // pred_region
          %s281 = smul.u32 2, %s18
          %p282 = scmp.lt.s32.totalorder %s281, 3
          %s283 = scalar_select %p282, %s281, 3
          %s284 = smul.addr %s283, 4
          %s285 = scalar_lea.vmem %s1, %s284
          %s286 = smul.u32 2, %s18
        $region48: #{tpu_custom_call.1} parent=39 // pred_fallthru
          _
      $region40: #{tpu_custom_call.1} parent=5 // pred_fallthru
        _
      %p287 = scmp.le.s32.totalorder 1, %s18
      %p288 = scmp.lt.s32.totalorder %s18, 3
      %p289 = pnand %p287, %p288
      %p290 = pneg %p289
      // Predicated region
      $region49: #{tpu_custom_call.1} parent=5 // pred_check
        _
      $region50: #{tpu_custom_call.1} parent=5 // pred_check_branch
        %292 = sbr.rel (%p289) target = $region52
      $region51: #{tpu_custom_call.1} parent=5 // pred_region
        %s293 = ssub.s32 %s18, 1
        // Predicated region
        $region53: #{tpu_custom_call.1} parent=51 // pred_check
          %p294 = pneg %p133
        $region54: #{tpu_custom_call.1} parent=51 // pred_check_branch
          %296 = sbr.rel (%p294) target = $region56
        $region55: #{tpu_custom_call.1} parent=51 // pred_region
          %297 = dma.done [#allocation3], 2048
        $region56: #{tpu_custom_call.1} parent=51 // pred_fallthru
          _
        %s298 = smul.u32 2, %s23
        %p299 = scmp.lt.s32.totalorder %s298, 3
        %s300 = scalar_select %p299, %s298, 3
        %s301 = smul.addr %s300, 4
        %s302 = scalar_lea.vmem %s0, %s301
        %p303 = pneg %p44
        %p304 = pneg %p41
        %s305 = smul.u32 2, %s23
        %p306 = scmp.lt.s32.totalorder %s305, 3
        %s307 = scalar_select %p306, %s305, 3
        %s308 = smul.addr %s307, 4
        %s309 = scalar_lea.vmem %s1, %s308
        %p310 = pneg %p70
        %p311 = pneg %p67
        %p312 = pneg %p91
        %p313 = pneg %p88
        %p314 = pneg %p112
        %p315 = pneg %p109
        %p316 = pneg %p133
        %p317 = pneg %p130
        %p318 = pneg %p154
        %p319 = pneg %p151
        %p320 = pneg %p175
        %p321 = pneg %p172
        %p322 = pneg %p196
        %p323 = pneg %p193
        %p324 = pneg %p222
        %p325 = pneg %p219
        %s326 = sand.u32 %s209, 1
        %s327 = scalar_lea.sflag [#allocation4], %s326
        %s328 = sand.u32 %s209, 1
        %s329 = smul.addr %s328, 2
        %s330 = scalar_lea.vmem [#allocation5], %s329
        %s331 = smul.u32 2, %s23
        %p332 = scmp.lt.s32.totalorder %s331, 3
        %s333 = scalar_select %p332, %s331, 3
        %s334 = smul.addr %s333, 4
        %s335 = scalar_lea.vmem %s0, %s334
        %s336 = smul.u32 2, %s23
        %s337 = smul.u32 2, %s23
        %p338 = scmp.lt.s32.totalorder %s337, 3
        %s339 = scalar_select %p338, %s337, 3
        %s340 = smul.addr %s339, 4
        %s341 = scalar_lea.vmem %s1, %s340
        %s342 = smul.u32 2, %s23
        %v344 = vld [vmem:[%s341] sm:$0xf]
        %v345 = vld [vmem:[%s341 + $0x4] sm:$0xf]
        %v346 = vunpack.c.l.bf16 %v344
        %v347 = vunpack.c.l.bf16 %v345
        %v348 = vld [vmem:[%s335] sm:$0xf]
        %v349 = vld [vmem:[%s335 + $0x4] sm:$0xf]
        %v350 = vld [vmem:[%s2] sm:$0xf]
        %v351 = vld [vmem:[%s2 + $0x4] sm:$0xf]
        %v354 = vunpack.c.l.b16 %v348
        %v355 = vunpack.c.l.b16 %v349
        %v356 = vpack.c.b16 %v355, %v354
        %v359 = vunpack.c.l.b16 %v350
        %v360 = vunpack.c.l.b16 %v351
        %v361 = vpack.c.b16 %v360, %v359
        %vm363 = vcmask 130048
        %v365 = vsel %vm363, %v356, 0
        %367 = vmatprep.subr.bf16.mxu0 0
        %368 = vmatpush1.bf16.msra.mxu0 0
        %369 = vmatprep.subr.bf16.mxu0 0
        %370 = vmatpush1.bf16.msra.mxu0 0
        %371 = vmatprep.subr.bf16.mxu0 0
        %372 = vmatpush1.bf16.msra.mxu0 0
        %373 = vmatprep.subr.bf16.mxu0 0
        %374 = vmatpush1.bf16.msra.mxu0 0
        %375 = vmatprep.subr.bf16.mxu0 0
        %376 = vmatpush1.bf16.msra.mxu0 0
        %377 = vmatprep.subr.bf16.mxu0 0
        %378 = vmatpush1.bf16.msra.mxu0 0
        %379 = vmatprep.subr.bf16.mxu0 0
        %380 = vmatpush1.bf16.msra.mxu0 0
        %381 = vmatprep.subr.bf16.mxu0 0
        %382 = vmatpush1.bf16.msra.mxu0 %v361
        %383 = vmatprep.subr.bf16.mxu0 0
        %384 = vmatpush2.bf16.msra.mxu0 0
        %385 = vmatprep.subr.bf16.mxu0 0
        %386 = vmatpush2.bf16.msra.mxu0 0
        %387 = vmatprep.subr.bf16.mxu0 0
        %388 = vmatpush2.bf16.msra.mxu0 0
        %389 = vmatprep.subr.bf16.mxu0 0
        %390 = vmatpush2.bf16.msra.mxu0 0
        %391 = vmatprep.subr.bf16.mxu0 0
        %392 = vmatpush2.bf16.msra.mxu0 0
        %393 = vmatprep.subr.bf16.mxu0 0
        %394 = vmatpush2.bf16.msra.mxu0 0
        %395 = vmatprep.subr.bf16.mxu0 0
        %396 = vmatpush2.bf16.msra.mxu0 0
        %397 = vmatprep.subr.bf16.mxu0 0
        %398 = vmatpush2.bf16.msra.mxu0 0
        %399 = vmatprep.mubr.bf16.mxu0 0
        %400 = vmatmul.mubr.bf16.gmra.mxu0 %v365
        %v401 = vpop.f32.mrf.mxu0
        %v402 = vadd.f32 0.0, %v401
        %v403 = vpop.f32.mrf.mxu0
        %v404 = vpop.f32.mrf.mxu0
        %v405 = vadd.f32 0.0, %v404
        %v406 = vpop.f32.mrf.mxu0
        %407 = vdwg.mxu0
        %vm408 = vcmask 64512
        %v410 = vsel %vm408, %v346, 0
        %412 = vmatprep.subr.mxu0 0.0
        %413 = vmatpush1.msra.mxu0 0.0
        %414 = vmatprep.subr.mxu0 0.0
        %415 = vmatpush1.msra.mxu0 0.0
        %416 = vmatprep.subr.mxu0 0.0
        %417 = vmatpush1.msra.mxu0 0.0
        %418 = vmatprep.subr.mxu0 0.0
        %419 = vmatpush1.msra.mxu0 0.0
        %420 = vmatprep.subr.mxu0 0.0
        %421 = vmatpush1.msra.mxu0 0.0
        %422 = vmatprep.subr.mxu0 0.0
        %423 = vmatpush1.msra.mxu0 0.0
        %424 = vmatprep.subr.mxu0 0.0
        %425 = vmatpush1.msra.mxu0 0.0
        %426 = vmatprep.subr.mxu0 0.0
        %427 = vmatpush1.msra.mxu0 0.0
        %428 = vmatprep.subr.mxu0 0.0
        %429 = vmatpush1.msra.mxu0 0.0
        %430 = vmatprep.subr.mxu0 0.0
        %431 = vmatpush1.msra.mxu0 0.0
        %432 = vmatprep.subr.mxu0 0.0
        %433 = vmatpush1.msra.mxu0 0.0
        %434 = vmatprep.subr.mxu0 0.0
        %435 = vmatpush1.msra.mxu0 0.0
        %436 = vmatprep.subr.mxu0 0.0
        %437 = vmatpush1.msra.mxu0 0.0
        %438 = vmatprep.subr.mxu0 0.0
        %439 = vmatpush1.msra.mxu0 0.0
        %440 = vmatprep.subr.mxu0 0.0
        %441 = vmatpush1.msra.mxu0 0.0
        %442 = vmatprep.subr.mxu0 0.0
        %443 = vmatpush1.msra.mxu0 %v402
        %444 = vmatprep.subr.mxu0 0.0
        %445 = vmatpush2.msra.mxu0 0.0
        %446 = vmatprep.subr.mxu0 0.0
        %447 = vmatpush2.msra.mxu0 0.0
        %448 = vmatprep.subr.mxu0 0.0
        %449 = vmatpush2.msra.mxu0 0.0
        %450 = vmatprep.subr.mxu0 0.0
        %451 = vmatpush2.msra.mxu0 0.0
        %452 = vmatprep.subr.mxu0 0.0
        %453 = vmatpush2.msra.mxu0 0.0
        %454 = vmatprep.subr.mxu0 0.0
        %455 = vmatpush2.msra.mxu0 0.0
        %456 = vmatprep.subr.mxu0 0.0
        %457 = vmatpush2.msra.mxu0 0.0
        %458 = vmatprep.subr.mxu0 0.0
        %459 = vmatpush2.msra.mxu0 0.0
        %460 = vmatprep.subr.mxu0 0.0
        %461 = vmatpush2.msra.mxu0 0.0
        %462 = vmatprep.subr.mxu0 0.0
        %463 = vmatpush2.msra.mxu0 0.0
        %464 = vmatprep.subr.mxu0 0.0
        %465 = vmatpush2.msra.mxu0 0.0
        %466 = vmatprep.subr.mxu0 0.0
        %467 = vmatpush2.msra.mxu0 0.0
        %468 = vmatprep.subr.mxu0 0.0
        %469 = vmatpush2.msra.mxu0 0.0
        %470 = vmatprep.subr.mxu0 0.0
        %471 = vmatpush2.msra.mxu0 0.0
        %472 = vmatprep.subr.mxu0 0.0
        %473 = vmatpush2.msra.mxu0 0.0
        %474 = vmatprep.subr.mxu0 0.0
        %475 = vmatpush2.msra.mxu0 0.0
        %476 = vmatprep.mubr.f32.mxu0 0.0
        %477 = vmatmul.mubr.f32.gmra.mxu0 %v410
        %v478 = vpop.f32.mrf.mxu0
        %v479 = vadd.f32 0.0, %v478
        %v480 = vpop.f32.mrf.mxu0
        %481 = vdwg.mxu0
        %v482 = vmax.f32 %v479, 0.0
        %v484 = vsel %vm408, %v347, 0
        %486 = vmatprep.subr.mxu0 0.0
        %487 = vmatpush1.msra.mxu0 0.0
        %488 = vmatprep.subr.mxu0 0.0
        %489 = vmatpush1.msra.mxu0 0.0
        %490 = vmatprep.subr.mxu0 0.0
        %491 = vmatpush1.msra.mxu0 0.0
        %492 = vmatprep.subr.mxu0 0.0
        %493 = vmatpush1.msra.mxu0 0.0
        %494 = vmatprep.subr.mxu0 0.0
        %495 = vmatpush1.msra.mxu0 0.0
        %496 = vmatprep.subr.mxu0 0.0
        %497 = vmatpush1.msra.mxu0 0.0
        %498 = vmatprep.subr.mxu0 0.0
        %499 = vmatpush1.msra.mxu0 0.0
        %500 = vmatprep.subr.mxu0 0.0
        %501 = vmatpush1.msra.mxu0 0.0
        %502 = vmatprep.subr.mxu0 0.0
        %503 = vmatpush1.msra.mxu0 0.0
        %504 = vmatprep.subr.mxu0 0.0
        %505 = vmatpush1.msra.mxu0 0.0
        %506 = vmatprep.subr.mxu0 0.0
        %507 = vmatpush1.msra.mxu0 0.0
        %508 = vmatprep.subr.mxu0 0.0
        %509 = vmatpush1.msra.mxu0 0.0
        %510 = vmatprep.subr.mxu0 0.0
        %511 = vmatpush1.msra.mxu0 0.0
        %512 = vmatprep.subr.mxu0 0.0
        %513 = vmatpush1.msra.mxu0 0.0
        %514 = vmatprep.subr.mxu0 0.0
        %515 = vmatpush1.msra.mxu0 0.0
        %516 = vmatprep.subr.mxu0 0.0
        %517 = vmatpush1.msra.mxu0 %v405
        %518 = vmatprep.subr.mxu0 0.0
        %519 = vmatpush2.msra.mxu0 0.0
        %520 = vmatprep.subr.mxu0 0.0
        %521 = vmatpush2.msra.mxu0 0.0
        %522 = vmatprep.subr.mxu0 0.0
        %523 = vmatpush2.msra.mxu0 0.0
        %524 = vmatprep.subr.mxu0 0.0
        %525 = vmatpush2.msra.mxu0 0.0
        %526 = vmatprep.subr.mxu0 0.0
        %527 = vmatpush2.msra.mxu0 0.0
        %528 = vmatprep.subr.mxu0 0.0
        %529 = vmatpush2.msra.mxu0 0.0
        %530 = vmatprep.subr.mxu0 0.0
        %531 = vmatpush2.msra.mxu0 0.0
        %532 = vmatprep.subr.mxu0 0.0
        %533 = vmatpush2.msra.mxu0 0.0
        %534 = vmatprep.subr.mxu0 0.0
        %535 = vmatpush2.msra.mxu0 0.0
        %536 = vmatprep.subr.mxu0 0.0
        %537 = vmatpush2.msra.mxu0 0.0
        %538 = vmatprep.subr.mxu0 0.0
        %539 = vmatpush2.msra.mxu0 0.0
        %540 = vmatprep.subr.mxu0 0.0
        %541 = vmatpush2.msra.mxu0 0.0
        %542 = vmatprep.subr.mxu0 0.0
        %543 = vmatpush2.msra.mxu0 0.0
        %544 = vmatprep.subr.mxu0 0.0
        %545 = vmatpush2.msra.mxu0 0.0
        %546 = vmatprep.subr.mxu0 0.0
        %547 = vmatpush2.msra.mxu0 0.0
        %548 = vmatprep.subr.mxu0 0.0
        %549 = vmatpush2.msra.mxu0 0.0
        %550 = vmatprep.mubr.f32.mxu0 0.0
        %551 = vmatmul.mubr.f32.gmra.mxu0 %v484
        %v552 = vpop.f32.mrf.mxu0
        %v553 = vadd.f32 0.0, %v552
        %v554 = vpop.f32.mrf.mxu0
        %555 = vdwg.mxu0
        %v556 = vmax.f32 %v553, 0.0
        %v557 = vld [vmem:[%s3] sm:$0xf]
        %v558 = vld [vmem:[%s3 + $0x4] sm:$0xf]
        %v559 = vld [vmem:[%s3 + $0x8] sm:$0xf]
        %v560 = vld [vmem:[%s3 + $0xc] sm:$0xf]
        %v561 = vunpack.c.l.bf16 %v557
        %v562 = vunpack.c.l.bf16 %v558
        %v563 = vunpack.c.l.bf16 %v559
        %v564 = vunpack.c.l.bf16 %v560
        %vm565 = vcmask 261120
        %v567 = vsel %vm565, %v482, 0
        %v570 = vsel %vm565, %v556, 0
        %572 = vmatprep.subr.mxu0 0.0
        %573 = vmatpush1.msra.mxu0 0.0
        %574 = vmatprep.subr.mxu0 0.0
        %575 = vmatpush1.msra.mxu0 0.0
        %576 = vmatprep.subr.mxu0 0.0
        %577 = vmatpush1.msra.mxu0 0.0
        %578 = vmatprep.subr.mxu0 0.0
        %579 = vmatpush1.msra.mxu0 0.0
        %580 = vmatprep.subr.mxu0 0.0
        %581 = vmatpush1.msra.mxu0 0.0
        %582 = vmatprep.subr.mxu0 0.0
        %583 = vmatpush1.msra.mxu0 0.0
        %584 = vmatprep.subr.mxu0 0.0
        %585 = vmatpush1.msra.mxu0 0.0
        %586 = vmatprep.subr.mxu0 0.0
        %587 = vmatpush1.msra.mxu0 0.0
        %588 = vmatprep.subr.mxu0 0.0
        %589 = vmatpush1.msra.mxu0 0.0
        %590 = vmatprep.subr.mxu0 0.0
        %591 = vmatpush1.msra.mxu0 0.0
        %592 = vmatprep.subr.mxu0 0.0
        %593 = vmatpush1.msra.mxu0 0.0
        %594 = vmatprep.subr.mxu0 0.0
        %595 = vmatpush1.msra.mxu0 0.0
        %596 = vmatprep.subr.mxu0 0.0
        %597 = vmatpush1.msra.mxu0 %v564
        %598 = vmatprep.subr.mxu0 0.0
        %599 = vmatpush1.msra.mxu0 %v563
        %600 = vmatprep.subr.mxu0 0.0
        %601 = vmatpush1.msra.mxu0 %v562
        %602 = vmatprep.subr.mxu0 0.0
        %603 = vmatpush1.msra.mxu0 %v561
        %604 = vmatprep.subr.mxu0 0.0
        %605 = vmatpush2.msra.mxu0 0.0
        %606 = vmatprep.subr.mxu0 0.0
        %607 = vmatpush2.msra.mxu0 0.0
        %608 = vmatprep.subr.mxu0 0.0
        %609 = vmatpush2.msra.mxu0 0.0
        %610 = vmatprep.subr.mxu0 0.0
        %611 = vmatpush2.msra.mxu0 0.0
        %612 = vmatprep.subr.mxu0 0.0
        %613 = vmatpush2.msra.mxu0 0.0
        %614 = vmatprep.subr.mxu0 0.0
        %615 = vmatpush2.msra.mxu0 0.0
        %616 = vmatprep.subr.mxu0 0.0
        %617 = vmatpush2.msra.mxu0 0.0
        %618 = vmatprep.subr.mxu0 0.0
        %619 = vmatpush2.msra.mxu0 0.0
        %620 = vmatprep.subr.mxu0 0.0
        %621 = vmatpush2.msra.mxu0 0.0
        %622 = vmatprep.subr.mxu0 0.0
        %623 = vmatpush2.msra.mxu0 0.0
        %624 = vmatprep.subr.mxu0 0.0
        %625 = vmatpush2.msra.mxu0 0.0
        %626 = vmatprep.subr.mxu0 0.0
        %627 = vmatpush2.msra.mxu0 0.0
        %628 = vmatprep.subr.mxu0 0.0
        %629 = vmatpush2.msra.mxu0 0.0
        %630 = vmatprep.subr.mxu0 0.0
        %631 = vmatpush2.msra.mxu0 0.0
        %632 = vmatprep.subr.mxu0 0.0
        %633 = vmatpush2.msra.mxu0 0.0
        %634 = vmatprep.subr.mxu0 0.0
        %635 = vmatpush2.msra.mxu0 0.0
        %636 = vmatprep.mubr.f32.mxu0 0.0
        %637 = vmatmul.mubr.f32.gmra.mxu0 %v567
        %v638 = vpop.f32.mrf.mxu0
        %v639 = vadd.f32 0.0, %v638
        %v640 = vpop.f32.mrf.mxu0
        %641 = vmatprep.mubr.f32.mxu0 0.0
        %642 = vmatmul.mubr.f32.gmra.mxu0 %v570
        %v643 = vpop.f32.mrf.mxu0
        %v644 = vadd.f32 0.0, %v643
        %v645 = vpop.f32.mrf.mxu0
        %646 = vdwg.mxu0
        %647 = vmatprep.subr.mxu0 0.0
        %648 = vmatpush1.msra.mxu0 0.0
        %649 = vmatprep.subr.mxu0 0.0
        %650 = vmatpush1.msra.mxu0 0.0
        %651 = vmatprep.subr.mxu0 0.0
        %652 = vmatpush1.msra.mxu0 0.0
        %653 = vmatprep.subr.mxu0 0.0
        %654 = vmatpush1.msra.mxu0 0.0
        %655 = vmatprep.subr.mxu0 0.0
        %656 = vmatpush1.msra.mxu0 0.0
        %657 = vmatprep.subr.mxu0 0.0
        %658 = vmatpush1.msra.mxu0 0.0
        %659 = vmatprep.subr.mxu0 0.0
        %660 = vmatpush1.msra.mxu0 0.0
        %661 = vmatprep.subr.mxu0 0.0
        %662 = vmatpush1.msra.mxu0 0.0
        %663 = vmatprep.subr.mxu0 0.0
        %664 = vmatpush1.msra.mxu0 0.0
        %665 = vmatprep.subr.mxu0 0.0
        %666 = vmatpush1.msra.mxu0 0.0
        %667 = vmatprep.subr.mxu0 0.0
        %668 = vmatpush1.msra.mxu0 0.0
        %669 = vmatprep.subr.mxu0 0.0
        %670 = vmatpush1.msra.mxu0 0.0
        %671 = vmatprep.subr.mxu0 0.0
        %672 = vmatpush1.msra.mxu0 0.0
        %673 = vmatprep.subr.mxu0 0.0
        %674 = vmatpush1.msra.mxu0 0.0
        %675 = vmatprep.subr.mxu0 0.0
        %676 = vmatpush1.msra.mxu0 0.0
        %677 = vmatprep.subr.mxu0 0.0
        %678 = vmatpush1.msra.mxu0 %v639
        %679 = vmatprep.subr.mxu0 0.0
        %680 = vmatpush2.msra.mxu0 0.0
        %681 = vmatprep.subr.mxu0 0.0
        %682 = vmatpush2.msra.mxu0 0.0
        %683 = vmatprep.subr.mxu0 0.0
        %684 = vmatpush2.msra.mxu0 0.0
        %685 = vmatprep.subr.mxu0 0.0
        %686 = vmatpush2.msra.mxu0 0.0
        %687 = vmatprep.subr.mxu0 0.0
        %688 = vmatpush2.msra.mxu0 0.0
        %689 = vmatprep.subr.mxu0 0.0
        %690 = vmatpush2.msra.mxu0 0.0
        %691 = vmatprep.subr.mxu0 0.0
        %692 = vmatpush2.msra.mxu0 0.0
        %693 = vmatprep.subr.mxu0 0.0
        %694 = vmatpush2.msra.mxu0 0.0
        %695 = vmatprep.subr.mxu0 0.0
        %696 = vmatpush2.msra.mxu0 0.0
        %697 = vmatprep.subr.mxu0 0.0
        %698 = vmatpush2.msra.mxu0 0.0
        %699 = vmatprep.subr.mxu0 0.0
        %700 = vmatpush2.msra.mxu0 0.0
        %701 = vmatprep.subr.mxu0 0.0
        %702 = vmatpush2.msra.mxu0 0.0
        %703 = vmatprep.subr.mxu0 0.0
        %704 = vmatpush2.msra.mxu0 0.0
        %705 = vmatprep.subr.mxu0 0.0
        %706 = vmatpush2.msra.mxu0 0.0
        %707 = vmatprep.subr.mxu0 0.0
        %708 = vmatpush2.msra.mxu0 0.0
        %709 = vmatprep.subr.mxu0 0.0
        %710 = vmatpush2.msra.mxu0 0.0
        %711 = vmatprep.mubr.f32.mxu0 0.0
        %712 = vmatmul.mubr.f32.gmra.mxu0 %v410
        %v713 = vpop.f32.mrf.mxu0
        %v714 = vadd.f32 0.0, %v713
        %v715 = vpop.f32.mrf.mxu0
        %716 = vdwg.mxu0
        %v717 = vmax.f32 %v714, 0.0
        %718 = vmatprep.subr.mxu0 0.0
        %719 = vmatpush1.msra.mxu0 0.0
        %720 = vmatprep.subr.mxu0 0.0
        %721 = vmatpush1.msra.mxu0 0.0
        %722 = vmatprep.subr.mxu0 0.0
        %723 = vmatpush1.msra.mxu0 0.0
        %724 = vmatprep.subr.mxu0 0.0
        %725 = vmatpush1.msra.mxu0 0.0
        %726 = vmatprep.subr.mxu0 0.0
        %727 = vmatpush1.msra.mxu0 0.0
        %728 = vmatprep.subr.mxu0 0.0
        %729 = vmatpush1.msra.mxu0 0.0
        %730 = vmatprep.subr.mxu0 0.0
        %731 = vmatpush1.msra.mxu0 0.0
        %732 = vmatprep.subr.mxu0 0.0
        %733 = vmatpush1.msra.mxu0 0.0
        %734 = vmatprep.subr.mxu0 0.0
        %735 = vmatpush1.msra.mxu0 0.0
        %736 = vmatprep.subr.mxu0 0.0
        %737 = vmatpush1.msra.mxu0 0.0
        %738 = vmatprep.subr.mxu0 0.0
        %739 = vmatpush1.msra.mxu0 0.0
        %740 = vmatprep.subr.mxu0 0.0
        %741 = vmatpush1.msra.mxu0 0.0
        %742 = vmatprep.subr.mxu0 0.0
        %743 = vmatpush1.msra.mxu0 0.0
        %744 = vmatprep.subr.mxu0 0.0
        %745 = vmatpush1.msra.mxu0 0.0
        %746 = vmatprep.subr.mxu0 0.0
        %747 = vmatpush1.msra.mxu0 0.0
        %748 = vmatprep.subr.mxu0 0.0
        %749 = vmatpush1.msra.mxu0 %v644
        %750 = vmatprep.subr.mxu0 0.0
        %751 = vmatpush2.msra.mxu0 0.0
        %752 = vmatprep.subr.mxu0 0.0
        %753 = vmatpush2.msra.mxu0 0.0
        %754 = vmatprep.subr.mxu0 0.0
        %755 = vmatpush2.msra.mxu0 0.0
        %756 = vmatprep.subr.mxu0 0.0
        %757 = vmatpush2.msra.mxu0 0.0
        %758 = vmatprep.subr.mxu0 0.0
        %759 = vmatpush2.msra.mxu0 0.0
        %760 = vmatprep.subr.mxu0 0.0
        %761 = vmatpush2.msra.mxu0 0.0
        %762 = vmatprep.subr.mxu0 0.0
        %763 = vmatpush2.msra.mxu0 0.0
        %764 = vmatprep.subr.mxu0 0.0
        %765 = vmatpush2.msra.mxu0 0.0
        %766 = vmatprep.subr.mxu0 0.0
        %767 = vmatpush2.msra.mxu0 0.0
        %768 = vmatprep.subr.mxu0 0.0
        %769 = vmatpush2.msra.mxu0 0.0
        %770 = vmatprep.subr.mxu0 0.0
        %771 = vmatpush2.msra.mxu0 0.0
        %772 = vmatprep.subr.mxu0 0.0
        %773 = vmatpush2.msra.mxu0 0.0
        %774 = vmatprep.subr.mxu0 0.0
        %775 = vmatpush2.msra.mxu0 0.0
        %776 = vmatprep.subr.mxu0 0.0
        %777 = vmatpush2.msra.mxu0 0.0
        %778 = vmatprep.subr.mxu0 0.0
        %779 = vmatpush2.msra.mxu0 0.0
        %780 = vmatprep.subr.mxu0 0.0
        %781 = vmatpush2.msra.mxu0 0.0
        %782 = vmatprep.mubr.f32.mxu0 0.0
        %783 = vmatmul.mubr.f32.gmra.mxu0 %v484
        %v784 = vpop.f32.mrf.mxu0
        %v785 = vadd.f32 0.0, %v784
        %v786 = vpop.f32.mrf.mxu0
        %787 = vdwg.mxu0
        %v788 = vmax.f32 %v785, 0.0
        %v790 = vrot.slane %v717, 1
        %791 = vrot.lane.b32.xlu0 %v790, 32
        %v792 = vpop.permute.xlu0 %791
        %v794 = vrot.slane %v717, 2
        %795 = vrot.lane.b32.xlu0 %v794, 64
        %v796 = vpop.permute.xlu0 %795
        %v798 = vrot.slane %v717, 3
        %799 = vrot.lane.b32.xlu0 %v798, 96
        %v800 = vpop.permute.xlu0 %799
        %v802 = vrot.slane %v717, 4
        %v804 = vrot.slane %v717, 5
        %805 = vrot.lane.b32.xlu0 %v804, 32
        %v806 = vpop.permute.xlu0 %805
        %v808 = vrot.slane %v717, 6
        %809 = vrot.lane.b32.xlu0 %v808, 64
        %v810 = vpop.permute.xlu0 %809
        %v812 = vrot.slane %v717, 7
        %813 = vrot.lane.b32.xlu0 %v812, 96
        %v814 = vpop.permute.xlu0 %813
        %v816 = vsel %vm565, %v717, %v792
        %vm817 = vcmask 523264
        %v818 = vsel %vm817, %v816, %v796
        %vm819 = vcmask 785408
        %v820 = vsel %vm819, %v818, %v800
        %v821 = vsel %vm565, %v802, %v806
        %v822 = vsel %vm817, %v821, %v810
        %v823 = vsel %vm819, %v822, %v814
        %v825 = vrot.slane %v788, 1
        %826 = vrot.lane.b32.xlu0 %v825, 32
        %v827 = vpop.permute.xlu0 %826
        %v829 = vrot.slane %v788, 2
        %830 = vrot.lane.b32.xlu0 %v829, 64
        %v831 = vpop.permute.xlu0 %830
        %v833 = vrot.slane %v788, 3
        %834 = vrot.lane.b32.xlu0 %v833, 96
        %v835 = vpop.permute.xlu0 %834
        %v837 = vrot.slane %v788, 4
        %v839 = vrot.slane %v788, 5
        %840 = vrot.lane.b32.xlu0 %v839, 32
        %v841 = vpop.permute.xlu0 %840
        %v843 = vrot.slane %v788, 6
        %844 = vrot.lane.b32.xlu0 %v843, 64
        %v845 = vpop.permute.xlu0 %844
        %v847 = vrot.slane %v788, 7
        %848 = vrot.lane.b32.xlu0 %v847, 96
        %v849 = vpop.permute.xlu0 %848
        %v851 = vsel %vm565, %v788, %v827
        %v852 = vsel %vm817, %v851, %v831
        %v853 = vsel %vm819, %v852, %v835
        %v854 = vsel %vm565, %v837, %v841
        %v855 = vsel %vm817, %v854, %v845
        %v856 = vsel %vm819, %v855, %v849
        %v859 = vrot.slane %v853, 7
        %v860 = vrot.slane %v856, 7
        %vm863 = vcmask 1040384
        %v864 = vsel %vm863, %v820, %v859
        %v865 = vsel %vm863, %v823, %v860
        %v866 = vld [vmem:[#allocation2] sm:$0xf]
        %v867 = vld [vmem:[#allocation2 + $0x4] sm:$0xf]
        %v868 = vld [vmem:[#allocation2 + $0x8] sm:$0xf]
        %v869 = vld [vmem:[#allocation2 + $0xc] sm:$0xf]
        %v870 = vld [vmem:[#allocation2 + $0x10] sm:$0xf]
        %v871 = vld [vmem:[#allocation2 + $0x14] sm:$0xf]
        %v872 = vld [vmem:[#allocation2 + $0x18] sm:$0xf]
        %v873 = vld [vmem:[#allocation2 + $0x1c] sm:$0xf]
        %v874 = vld [vmem:[#allocation2 + $0x20] sm:$0xf]
        %v875 = vld [vmem:[#allocation2 + $0x24] sm:$0xf]
        %v876 = vld [vmem:[#allocation2 + $0x28] sm:$0xf]
        %v877 = vld [vmem:[#allocation2 + $0x2c] sm:$0xf]
        %v878 = vld [vmem:[#allocation2 + $0x30] sm:$0xf]
        %v879 = vld [vmem:[#allocation2 + $0x34] sm:$0xf]
        %v880 = vld [vmem:[#allocation2 + $0x38] sm:$0xf]
        %v881 = vld [vmem:[#allocation2 + $0x3c] sm:$0xf]
        %v882 = vld [vmem:[#allocation2 + $0x40] sm:$0xf]
        %v883 = vld [vmem:[#allocation2 + $0x44] sm:$0xf]
        %v884 = vld [vmem:[#allocation2 + $0x48] sm:$0xf]
        %v885 = vld [vmem:[#allocation2 + $0x4c] sm:$0xf]
        %v886 = vld [vmem:[#allocation2 + $0x50] sm:$0xf]
        %v887 = vld [vmem:[#allocation2 + $0x54] sm:$0xf]
        %v888 = vld [vmem:[#allocation2 + $0x58] sm:$0xf]
        %v889 = vld [vmem:[#allocation2 + $0x5c] sm:$0xf]
        %v890 = vld [vmem:[#allocation2 + $0x60] sm:$0xf]
        %v891 = vld [vmem:[#allocation2 + $0x64] sm:$0xf]
        %v892 = vld [vmem:[#allocation2 + $0x68] sm:$0xf]
        %v893 = vld [vmem:[#allocation2 + $0x6c] sm:$0xf]
        %v894 = vld [vmem:[#allocation2 + $0x70] sm:$0xf]
        %v895 = vld [vmem:[#allocation2 + $0x74] sm:$0xf]
        %v896 = vld [vmem:[#allocation2 + $0x78] sm:$0xf]
        %v897 = vld [vmem:[#allocation2 + $0x7c] sm:$0xf]
        %v898 = vunpack.c.l.bf16 %v866
        %v899 = vunpack.c.l.bf16 %v867
        %v900 = vunpack.c.l.bf16 %v868
        %v901 = vunpack.c.l.bf16 %v869
        %v902 = vunpack.c.l.bf16 %v870
        %v903 = vunpack.c.l.bf16 %v871
        %v904 = vunpack.c.l.bf16 %v872
        %v905 = vunpack.c.l.bf16 %v873
        %v906 = vunpack.c.l.bf16 %v874
        %v907 = vunpack.c.l.bf16 %v875
        %v908 = vunpack.c.l.bf16 %v876
        %v909 = vunpack.c.l.bf16 %v877
        %v910 = vunpack.c.l.bf16 %v878
        %v911 = vunpack.c.l.bf16 %v879
        %v912 = vunpack.c.l.bf16 %v880
        %v913 = vunpack.c.l.bf16 %v881
        %v914 = vunpack.c.l.bf16 %v882
        %v915 = vunpack.c.l.bf16 %v883
        %v916 = vunpack.c.l.bf16 %v884
        %v917 = vunpack.c.l.bf16 %v885
        %v918 = vunpack.c.l.bf16 %v886
        %v919 = vunpack.c.l.bf16 %v887
        %v920 = vunpack.c.l.bf16 %v888
        %v921 = vunpack.c.l.bf16 %v889
        %v922 = vunpack.c.l.bf16 %v890
        %v923 = vunpack.c.l.bf16 %v891
        %v924 = vunpack.c.l.bf16 %v892
        %v925 = vunpack.c.l.bf16 %v893
        %v926 = vunpack.c.l.bf16 %v894
        %v927 = vunpack.c.l.bf16 %v895
        %v928 = vunpack.c.l.bf16 %v896
        %v929 = vunpack.c.l.bf16 %v897
        %v930 = vld [vmem:[%s5] sm:$0x1]
        %v932 = vlaneseq
        %v933 = vshrl.u32 %v932, 7
        %v934 = vsub.s32 0, %v933
        %v935 = vrot.slane %v930, %v934
        %937 = vmatprep.subr.mxu0 0.0
        %938 = vmatpush1.msra.mxu0 %v913
        %939 = vmatprep.subr.mxu0 0.0
        %940 = vmatpush1.msra.mxu0 %v912
        %941 = vmatprep.subr.mxu0 0.0
        %942 = vmatpush1.msra.mxu0 %v911
        %943 = vmatprep.subr.mxu0 0.0
        %944 = vmatpush1.msra.mxu0 %v910
        %945 = vmatprep.subr.mxu0 0.0
        %946 = vmatpush1.msra.mxu0 %v909
        %947 = vmatprep.subr.mxu0 0.0
        %948 = vmatpush1.msra.mxu0 %v908
        %949 = vmatprep.subr.mxu0 0.0
        %950 = vmatpush1.msra.mxu0 %v907
        %951 = vmatprep.subr.mxu0 0.0
        %952 = vmatpush1.msra.mxu0 %v906
        %953 = vmatprep.subr.mxu0 0.0
        %954 = vmatpush1.msra.mxu0 %v905
        %955 = vmatprep.subr.mxu0 0.0
        %956 = vmatpush1.msra.mxu0 %v904
        %957 = vmatprep.subr.mxu0 0.0
        %958 = vmatpush1.msra.mxu0 %v903
        %959 = vmatprep.subr.mxu0 0.0
        %960 = vmatpush1.msra.mxu0 %v902
        %961 = vmatprep.subr.mxu0 0.0
        %962 = vmatpush1.msra.mxu0 %v901
        %963 = vmatprep.subr.mxu0 0.0
        %964 = vmatpush1.msra.mxu0 %v900
        %965 = vmatprep.subr.mxu0 0.0
        %966 = vmatpush1.msra.mxu0 %v899
        %967 = vmatprep.subr.mxu0 0.0
        %968 = vmatpush1.msra.mxu0 %v898
        %969 = vmatprep.subr.mxu0 0.0
        %970 = vmatpush2.msra.mxu0 %v929
        %971 = vmatprep.subr.mxu0 0.0
        %972 = vmatpush2.msra.mxu0 %v928
        %973 = vmatprep.subr.mxu0 0.0
        %974 = vmatpush2.msra.mxu0 %v927
        %975 = vmatprep.subr.mxu0 0.0
        %976 = vmatpush2.msra.mxu0 %v926
        %977 = vmatprep.subr.mxu0 0.0
        %978 = vmatpush2.msra.mxu0 %v925
        %979 = vmatprep.subr.mxu0 0.0
        %980 = vmatpush2.msra.mxu0 %v924
        %981 = vmatprep.subr.mxu0 0.0
        %982 = vmatpush2.msra.mxu0 %v923
        %983 = vmatprep.subr.mxu0 0.0
        %984 = vmatpush2.msra.mxu0 %v922
        %985 = vmatprep.subr.mxu0 0.0
        %986 = vmatpush2.msra.mxu0 %v921
        %987 = vmatprep.subr.mxu0 0.0
        %988 = vmatpush2.msra.mxu0 %v920
        %989 = vmatprep.subr.mxu0 0.0
        %990 = vmatpush2.msra.mxu0 %v919
        %991 = vmatprep.subr.mxu0 0.0
        %992 = vmatpush2.msra.mxu0 %v918
        %993 = vmatprep.subr.mxu0 0.0
        %994 = vmatpush2.msra.mxu0 %v917
        %995 = vmatprep.subr.mxu0 0.0
        %996 = vmatpush2.msra.mxu0 %v916
        %997 = vmatprep.subr.mxu0 0.0
        %998 = vmatpush2.msra.mxu0 %v915
        %999 = vmatprep.subr.mxu0 0.0
        %1000 = vmatpush2.msra.mxu0 %v914
        %1001 = vmatprep.mubr.f32.mxu0 %v865
        %1002 = vmatmul.mubr.f32.gmra.mxu0 %v864
        %v1003 = vpop.f32.mrf.mxu0
        %v1004 = vadd.f32 %v935, %v1003
        %v1005 = vpop.f32.mrf.mxu0
        %1006 = vdwg.mxu0
        %v1007 = vmax.f32 %v1004, 0.0
        %v1008 = vld [vmem:[%s6] sm:$0xf]
        %v1009 = vld [vmem:[%s6 + $0x4] sm:$0xf]
        %v1010 = vld [vmem:[%s6 + $0x8] sm:$0xf]
        %v1011 = vld [vmem:[%s6 + $0xc] sm:$0xf]
        %v1012 = vld [vmem:[%s6 + $0x10] sm:$0xf]
        %v1013 = vld [vmem:[%s6 + $0x14] sm:$0xf]
        %v1014 = vld [vmem:[%s6 + $0x18] sm:$0xf]
        %v1015 = vld [vmem:[%s6 + $0x1c] sm:$0xf]
        %v1016 = vld [vmem:[%s6 + $0x20] sm:$0xf]
        %v1017 = vld [vmem:[%s6 + $0x24] sm:$0xf]
        %v1018 = vld [vmem:[%s6 + $0x28] sm:$0xf]
        %v1019 = vld [vmem:[%s6 + $0x2c] sm:$0xf]
        %v1020 = vld [vmem:[%s6 + $0x30] sm:$0xf]
        %v1021 = vld [vmem:[%s6 + $0x34] sm:$0xf]
        %v1022 = vld [vmem:[%s6 + $0x38] sm:$0xf]
        %v1023 = vld [vmem:[%s6 + $0x3c] sm:$0xf]
        %v1024 = vunpack.c.l.bf16 %v1008
        %v1025 = vunpack.c.l.bf16 %v1009
        %v1026 = vunpack.c.l.bf16 %v1010
        %v1027 = vunpack.c.l.bf16 %v1011
        %v1028 = vunpack.c.l.bf16 %v1012
        %v1029 = vunpack.c.l.bf16 %v1013
        %v1030 = vunpack.c.l.bf16 %v1014
        %v1031 = vunpack.c.l.bf16 %v1015
        %v1032 = vunpack.c.l.bf16 %v1016
        %v1033 = vunpack.c.l.bf16 %v1017
        %v1034 = vunpack.c.l.bf16 %v1018
        %v1035 = vunpack.c.l.bf16 %v1019
        %v1036 = vunpack.c.l.bf16 %v1020
        %v1037 = vunpack.c.l.bf16 %v1021
        %v1038 = vunpack.c.l.bf16 %v1022
        %v1039 = vunpack.c.l.bf16 %v1023
        %v1040 = vld [vmem:[%s7] sm:$0x1]
        %v1042 = vlaneseq
        %v1043 = vshrl.u32 %v1042, 7
        %v1044 = vsub.s32 0, %v1043
        %v1045 = vrot.slane %v1040, %v1044
        %1047 = vmatprep.subr.mxu0 0.0
        %1048 = vmatpush1.msra.mxu0 %v1039
        %1049 = vmatprep.subr.mxu0 0.0
        %1050 = vmatpush1.msra.mxu0 %v1038
        %1051 = vmatprep.subr.mxu0 0.0
        %1052 = vmatpush1.msra.mxu0 %v1037
        %1053 = vmatprep.subr.mxu0 0.0
        %1054 = vmatpush1.msra.mxu0 %v1036
        %1055 = vmatprep.subr.mxu0 0.0
        %1056 = vmatpush1.msra.mxu0 %v1035
        %1057 = vmatprep.subr.mxu0 0.0
        %1058 = vmatpush1.msra.mxu0 %v1034
        %1059 = vmatprep.subr.mxu0 0.0
        %1060 = vmatpush1.msra.mxu0 %v1033
        %1061 = vmatprep.subr.mxu0 0.0
        %1062 = vmatpush1.msra.mxu0 %v1032
        %1063 = vmatprep.subr.mxu0 0.0
        %1064 = vmatpush1.msra.mxu0 %v1031
        %1065 = vmatprep.subr.mxu0 0.0
        %1066 = vmatpush1.msra.mxu0 %v1030
        %1067 = vmatprep.subr.mxu0 0.0
        %1068 = vmatpush1.msra.mxu0 %v1029
        %1069 = vmatprep.subr.mxu0 0.0
        %1070 = vmatpush1.msra.mxu0 %v1028
        %1071 = vmatprep.subr.mxu0 0.0
        %1072 = vmatpush1.msra.mxu0 %v1027
        %1073 = vmatprep.subr.mxu0 0.0
        %1074 = vmatpush1.msra.mxu0 %v1026
        %1075 = vmatprep.subr.mxu0 0.0
        %1076 = vmatpush1.msra.mxu0 %v1025
        %1077 = vmatprep.subr.mxu0 0.0
        %1078 = vmatpush1.msra.mxu0 %v1024
        %1079 = vmatprep.subr.mxu0 0.0
        %1080 = vmatpush2.msra.mxu0 0.0
        %1081 = vmatprep.subr.mxu0 0.0
        %1082 = vmatpush2.msra.mxu0 0.0
        %1083 = vmatprep.subr.mxu0 0.0
        %1084 = vmatpush2.msra.mxu0 0.0
        %1085 = vmatprep.subr.mxu0 0.0
        %1086 = vmatpush2.msra.mxu0 0.0
        %1087 = vmatprep.subr.mxu0 0.0
        %1088 = vmatpush2.msra.mxu0 0.0
        %1089 = vmatprep.subr.mxu0 0.0
        %1090 = vmatpush2.msra.mxu0 0.0
        %1091 = vmatprep.subr.mxu0 0.0
        %1092 = vmatpush2.msra.mxu0 0.0
        %1093 = vmatprep.subr.mxu0 0.0
        %1094 = vmatpush2.msra.mxu0 0.0
        %1095 = vmatprep.subr.mxu0 0.0
        %1096 = vmatpush2.msra.mxu0 0.0
        %1097 = vmatprep.subr.mxu0 0.0
        %1098 = vmatpush2.msra.mxu0 0.0
        %1099 = vmatprep.subr.mxu0 0.0
        %1100 = vmatpush2.msra.mxu0 0.0
        %1101 = vmatprep.subr.mxu0 0.0
        %1102 = vmatpush2.msra.mxu0 0.0
        %1103 = vmatprep.subr.mxu0 0.0
        %1104 = vmatpush2.msra.mxu0 0.0
        %1105 = vmatprep.subr.mxu0 0.0
        %1106 = vmatpush2.msra.mxu0 0.0
        %1107 = vmatprep.subr.mxu0 0.0
        %1108 = vmatpush2.msra.mxu0 0.0
        %1109 = vmatprep.subr.mxu0 0.0
        %1110 = vmatpush2.msra.mxu0 0.0
        %1111 = vmatprep.mubr.f32.mxu0 0.0
        %1112 = vmatmul.mubr.f32.gmra.mxu0 %v1007
        %v1113 = vpop.f32.mrf.mxu0
        %v1114 = vadd.f32 %v1045, %v1113
        %v1115 = vpop.f32.mrf.mxu0
        %1116 = vdwg.mxu0
        %vm1117 = vcmask 58368
        %v1118 = vsel %vm1117, %v1114, -inf
        %1119 = vmax.xlane.f32.xlu0 %v1118
        %v1120 = vpop.xlane.xlu0 %1119
        %v1121 = vsub.f32 %v1114, %v1120
        %v1122 = vmul.f32 %v1121, 1.442695
        %v1123 = vpow.pop %v1122
        %v1124 = vsel %vm1117, %v1123, 0.0
        %1125 = vadd.xlane.f32.xlu0 %v1124
        %v1126 = vpop.xlane.xlu0 %1125
        %v1127 = vlog2.pop %v1126
        %v1128 = vmul.f32 %v1127, 0.6931472
        %v1129 = vsub.f32 %v1121, %v1128
        %1130 = vst.msk [vmem:[%s330] sm:$0x3] %vm1117, %v1129
        %s1131 = sand.u32 %s209, 1
        %s1132 = scalar_lea.sflag [#allocation4], %s1131
        %s1133 = sand.u32 %s209, 1
        %s1134 = smul.addr %s1133, 2
        %s1135 = scalar_lea.vmem [#allocation5], %s1134
        // Predicated region
        $region57: #{tpu_custom_call.1} parent=51 // pred_check
          %p1136 = pneg %p219
        $region58: #{tpu_custom_call.1} parent=51 // pred_check_branch
          %1138 = sbr.rel (%p1136) target = $region60
        $region59: #{tpu_custom_call.1} parent=51 // pred_region
          %s1140 = ssub.s32 32, 32
          %1141 = vsyncadd %s1132, %s1140
          %s1142 = smul.addr %s23, 32
          %s1143 = scalar_lea.hbm %s8, %s1142
          %s1145 = sshll.u32 %s1135, 4
          %s1146 = int_to_ptr.vmem [resolvable:$true] %s1145
          %1148 = dma.vmem_to_hbm [thread:$0]  %s1146, 32, %s1143, %s1132
        $region60: #{tpu_custom_call.1} parent=51 // pred_fallthru
          _
      $region52: #{tpu_custom_call.1} parent=5 // pred_fallthru
        _
      %p1149 = scmp.le.s32.totalorder 2, %s18
      // Predicated region
      $region61: #{tpu_custom_call.1} parent=5 // pred_check
        %p1150 = pneg %p1149
      $region62: #{tpu_custom_call.1} parent=5 // pred_check_branch
        %1152 = sbr.rel (%p1150) target = $region64
      $region63: #{tpu_custom_call.1} parent=5 // pred_region
        %s1153 = ssub.s32 %s18, 2
        // Predicated region
        $region65: #{tpu_custom_call.1} parent=63 // pred_check
          %p1154 = pneg %p225
        $region66: #{tpu_custom_call.1} parent=63 // pred_check_branch
          %1156 = sbr.rel (%p1154) target = $region68
        $region67: #{tpu_custom_call.1} parent=63 // pred_region
          %s1157 = sand.u32 %s210, 1
          %s1158 = scalar_lea.sflag [#allocation4], %s1157
          %s1159 = sand.u32 %s210, 1
          %s1160 = smul.addr %s1159, 2
          %s1161 = scalar_lea.vmem [#allocation5], %s1160
          %1162 = dma.done %s1158, 32
        $region68: #{tpu_custom_call.1} parent=63 // pred_fallthru
          _
      $region64: #{tpu_custom_call.1} parent=5 // pred_fallthru
        _
    $region6: #{tpu_custom_call.1} parent=1 // loop_footer
      %s22 = sadd.s32 1, %s18
    $region7: #{tpu_custom_call.1} parent=1 // loop_footer_branch
      %17 = sbr.rel target = $region3
    $region8: #{tpu_custom_call.1} parent=1 // loop_exit
      _
    %1163 = vsyncpa [#allocation3], 1
    %s1164 = scalar_lea.sflag [#allocation3], 1
    %1165 = vsyncpa %s1164, 1
    %1166 = vsyncpa [#allocation4], 1
    %s1167 = scalar_lea.sflag [#allocation4], 1
    %1168 = vsyncpa %s1167, 1

</llo_original>
